<compile_context>
chip_gen: v5e
topology: v5e:2x2
jax: 0.10.0
libtpu: 0.0.40
codegen_flags: <defaults>
</compile_context>

<pallas_src>
import functools

import jax
import jax.numpy as jnp
from jax.experimental import pallas as pl
from jax.experimental.pallas import tpu as pltpu


def _round_up(v, m):
    return ((v + m - 1) // m) * m


def lnexp_max_kernel(p_ref, a_ref, c_ref, o_ref, *, alpha, f, fpad):
    """One (batch, column-tile) grid step.

    p_ref: (Ppad, tm)        patch tile (rows P..Ppad-1 are edge-replicated)
    a_ref: (2*Fpad, 2*Ppad)  block-diag [exp(a*w1 - mw1), exp(a*w2 - mw2)]
    c_ref: (F, 1)            (mw1 + mw2)/alpha + bias
    o_ref: (F, tm)           lane-dense output tile
    """
    ax = alpha * p_ref[...].astype(jnp.float32)          # (Ppad, tm)

    mx = jnp.max(ax, axis=0, keepdims=True)              # (1, tm)
    mnx = -jnp.min(ax, axis=0, keepdims=True)            # (1, tm) == max(-ax)
    ex = jnp.exp(ax - mx)                                 # (Ppad, tm)
    enx = jnp.exp(-ax - mnx)                              # (Ppad, tm)

    # Tile-aligned stack (Ppad is a multiple of 8) -> single MXU matmul.
    xcat = jnp.concatenate([ex, enx], axis=0)             # (2*Ppad, tm)
    s = jnp.dot(a_ref[...], xcat,
                preferred_element_type=jnp.float32)       # (2*Fpad, tm)
    s1 = s[:f]                                            # (F, tm)
    s2 = s[fpad:fpad + f]                                 # (F, tm)

    # One log instead of two; s1, s2 in (0, P] so the product cannot overflow.
    y = (mx + mnx + jnp.log(s1 * s2)) * (1.0 / alpha) + c_ref[...]
    o_ref[...] = y.astype(o_ref.dtype)


def lnexp_max_layer_mae(x, w1, w2, bias, *, kernel_size, strides=(1, 1),
                        alpha=1.0, tm=2048):
    """x: (B, C, H, W) NCHW.  w1, w2: (P, F) with P = C*kh*kw.  bias: (F,)."""
    B, C, H, W = x.shape
    kh, kw = kernel_size
    sh, sw = strides
    F = bias.shape[0]
    P = C * kh * kw
    oh = (H - kh) // sh + 1
    ow = (W - kw) // sw + 1
    ohw = oh * ow
    alpha = float(alpha)

    # --- glue: VALID patch extraction (feature order = C, kh, kw) ---
    patches = jax.lax.conv_general_dilated_patches(
        x, filter_shape=(kh, kw), window_strides=(sh, sw), padding='VALID')
    # Natural layout kept: (B, P, oh*ow); no transpose of the expanded array.
    pm = patches.reshape(B, P, ohw).astype(jnp.float32)

    Ppad = _round_up(P, 8)
    Fpad = _round_up(F, 8)

    # Tile sizing: lane dim multiples of 128, big tiles by default, and keep
    # the grid >= 2 steps when possible so v7x's 2 TensorCores both get work.
    tm = max(128, (int(tm) // 128) * 128)
    n_pad = _round_up(ohw, 128)
    if n_pad <= tm:
        if B == 1 and n_pad >= 256:
            n_pad = _round_up(ohw, 256)
            tm = n_pad // 2
        else:
            tm = n_pad
    else:
        n_pad = _round_up(ohw, tm)

    # Edge-pad the patch rows (keeps per-column max/min exact; padded columns
    # of A are zero so these rows add nothing), zero-pad the spatial columns.
    pm = jnp.pad(pm, ((0, 0), (0, Ppad - P), (0, 0)), mode='edge')
    pm = jnp.pad(pm, ((0, 0), (0, 0), (0, n_pad - ohw)))

    # --- weight-side precompute (done once, outside the grid loop) ---
    w1t = jnp.asarray(w1, jnp.float32).reshape(P, F).T   # (F, P)
    w2t = jnp.asarray(w2, jnp.float32).reshape(P, F).T   # (F, P)
    aw1 = alpha * w1t
    aw2 = alpha * w2t
    mw1 = jnp.max(aw1, axis=1, keepdims=True)            # (F, 1)
    mw2 = jnp.max(aw2, axis=1, keepdims=True)            # (F, 1)
    e1 = jnp.exp(aw1 - mw1)                              # (F, P)
    e2 = jnp.exp(aw2 - mw2)                              # (F, P)
    # Block-diagonal fused weight matrix (zeros in all padded rows/columns).
    A = jnp.zeros((2 * Fpad, 2 * Ppad), jnp.float32)
    A = A.at[:F, :P].set(e1)
    A = A.at[Fpad:Fpad + F, Ppad:Ppad + P].set(e2)
    c = (mw1 + mw2) / alpha + jnp.asarray(bias, jnp.float32).reshape(F, 1)

    grid = (B, n_pad // tm)
    out = pl.pallas_call(
        functools.partial(lnexp_max_kernel, alpha=alpha, f=F, fpad=Fpad),
        out_shape=jax.ShapeDtypeStruct((B, F, n_pad), jnp.float32),
        grid_spec=pltpu.PrefetchScalarGridSpec(
            num_scalar_prefetch=0,
            grid=grid,
            in_specs=[
                # patch tile, natural (B, P, ohw) layout, batch dim squeezed
                pl.BlockSpec((pl.Squeezed(), Ppad, tm), lambda b, i: (b, 0, i)),
                # fused block-diagonal weight matrix, grid-resident
                pl.BlockSpec((2 * Fpad, 2 * Ppad), lambda b, i: (0, 0)),
                # combined constant, grid-resident
                pl.BlockSpec((F, 1), lambda b, i: (0, 0)),
            ],
            out_specs=pl.BlockSpec((pl.Squeezed(), F, tm),
                                   lambda b, i: (b, 0, i)),
        ),
        compiler_params=pltpu.CompilerParams(
            dimension_semantics=("parallel", "parallel")),
    )(pm, A, c)

    # (B, F, n_pad) -> (B, F, oh, ow): slice off the padded columns; no
    # transpose needed (output already NCHW-ordered).
    return out[:, :, :ohw].reshape(B, F, oh, ow)


def _reference(x, w1, w2, bias, kernel_size, strides, alpha):
    """Pure-JAX reference of the same forward semantics."""
    kh, kw = kernel_size
    patches = jax.lax.conv_general_dilated_patches(
        x, filter_shape=(kh, kw), window_strides=strides, padding='VALID')
    B, P, oh, ow = patches.shape
    F = bias.shape[0]
    w1b = w1.reshape(P, F)[None, :, :, None, None]
    w2b = w2.reshape(P, F)[None, :, :, None, None]
    p = patches[:, :, None, :, :]
    y11 = jax.scipy.special.logsumexp(alpha * (p + w1b), axis=1) / alpha
    y22 = jax.scipy.special.logsumexp(alpha * (-p + w2b), axis=1) / alpha
    return y11 + y22 + bias[None, :, None, None]


if __name__ == "__main__":
    # Module config: filters=8, input_shape=(C,H,W)=(4,16,16), kernel=(3,3)
    B, C, H, W = 2, 4, 16, 16
    filters = 8
    kernel_size = (3, 3)
    strides = (1, 1)
    alpha = 1.0
    P = C * kernel_size[0] * kernel_size[1]

    key = jax.random.PRNGKey(0)
    kx, kw1, kw2 = jax.random.split(key, 3)
    x = jax.random.normal(kx, (B, C, H, W), dtype=jnp.float32)
    w1 = 0.1 * jax.random.normal(kw1, (P, filters), dtype=jnp.float32)
    w2 = 0.1 * jax.random.normal(kw2, (P, filters), dtype=jnp.float32)
    bias = jnp.zeros((filters,), dtype=jnp.float32)   # matches torch.zeros init

    y = lnexp_max_layer_mae(x, w1, w2, bias, kernel_size=kernel_size,
                            strides=strides, alpha=alpha)
    y = jax.block_until_ready(y)

    y_ref = _reference(x, w1, w2, bias, kernel_size, strides, alpha)
    assert y.shape == (B, filters, H - 2, W - 2), y.shape
    assert jnp.allclose(y, y_ref, atol=1e-4, rtol=1e-4), float(
        jnp.max(jnp.abs(y - y_ref)))

    print("KERNEL_OK")
</pallas_src>

<mosaic_0001>
module attributes {stable_mosaic.version = 11 : i64} {
  func.func @lnexp_max_kernel(%arg0: i32, %arg1: i32, %arg2: memref<1x40x256xf32, #tpu.memory_space<vmem>>, %arg3: memref<16x80xf32, #tpu.memory_space<vmem>>, %arg4: memref<8x1xf32, #tpu.memory_space<vmem>>, %arg5: memref<1x8x256xf32, #tpu.memory_space<vmem>>) attributes {dimension_semantics = [#tpu.dimension_semantics<parallel>, #tpu.dimension_semantics<parallel>], iteration_bounds = array<i64: 2, 1>, scalar_prefetch = 0 : i64, scratch_operands = 0 : i64, tpu.core_type = #tpu.core_type<tc>, window_params = [{transform_indices = @transform_0, window_bounds = array<i64: 1, 40, 256>}, {pipeline_mode = #tpu.pipeline_mode<synchronous>, transform_indices = @transform_1, window_bounds = array<i64: 16, 80>}, {pipeline_mode = #tpu.pipeline_mode<synchronous>, transform_indices = @transform_2, window_bounds = array<i64: 8, 1>}, {transform_indices = @transform_3, window_bounds = array<i64: 1, 8, 256>}]} {
    %c0 = arith.constant 0 : index
    %c0_0 = arith.constant 0 : index
    %c0_1 = arith.constant 0 : index
    %0 = vector.load %arg2[%c0, %c0_0, %c0_1] : memref<1x40x256xf32, #tpu.memory_space<vmem>>, vector<1x40x256xf32>
    %1 = vector.shape_cast %0 : vector<1x40x256xf32> to vector<40x256xf32>
    %cst = arith.constant 1.000000e+00 : f32
    %2 = vector.broadcast %cst : f32 to vector<40x256xf32>
    %3 = arith.mulf %2, %1 : vector<40x256xf32>
    %cst_2 = arith.constant dense<0xFF800000> : vector<256xf32>
    %4 = vector.multi_reduction <maximumf>, %3, %cst_2 [0] : vector<40x256xf32> to vector<256xf32>
    %5 = vector.shape_cast %4 : vector<256xf32> to vector<1x256xf32>
    %cst_3 = arith.constant dense<0x7F800000> : vector<256xf32>
    %6 = vector.multi_reduction <minimumf>, %3, %cst_3 [0] : vector<40x256xf32> to vector<256xf32>
    %7 = vector.shape_cast %6 : vector<256xf32> to vector<1x256xf32>
    %cst_4 = arith.constant 0.000000e+00 : f32
    %8 = vector.broadcast %cst_4 : f32 to vector<1x256xf32>
    %9 = arith.subf %8, %7 : vector<1x256xf32>
    %10 = vector.broadcast %5 : vector<1x256xf32> to vector<40x256xf32>
    %11 = arith.subf %3, %10 : vector<40x256xf32>
    %12 = math.exp %11 : vector<40x256xf32>
    %cst_5 = arith.constant 0.000000e+00 : f32
    %13 = vector.broadcast %cst_5 : f32 to vector<40x256xf32>
    %14 = arith.subf %13, %3 : vector<40x256xf32>
    %15 = vector.broadcast %9 : vector<1x256xf32> to vector<40x256xf32>
    %16 = arith.subf %14, %15 : vector<40x256xf32>
    %17 = math.exp %16 : vector<40x256xf32>
    %18 = tpu.concatenate %12, %17 in 0 : vector<40x256xf32>, vector<40x256xf32> -> vector<80x256xf32>
    %c0_6 = arith.constant 0 : index
    %c0_7 = arith.constant 0 : index
    %19 = vector.load %arg3[%c0_6, %c0_7] : memref<16x80xf32, #tpu.memory_space<vmem>>, vector<16x80xf32>
    %cst_8 = arith.constant dense<0.000000e+00> : vector<16x256xf32>
    %20 = tpu.matmul %19, %18, %cst_8 {dimension_numbers = #tpu.dot_dimension_numbers<[1], [0], [0], [1], [0, 0, 1, 1], [], []>} : vector<16x80xf32>, vector<80x256xf32>, vector<16x256xf32> -> vector<16x256xf32>
    %21 = vector.extract_strided_slice %20 {offsets = [0, 0], sizes = [8, 256], strides = [1, 1]} : vector<16x256xf32> to vector<8x256xf32>
    %22 = vector.extract_strided_slice %20 {offsets = [8, 0], sizes = [8, 256], strides = [1, 1]} : vector<16x256xf32> to vector<8x256xf32>
    %23 = arith.addf %5, %9 : vector<1x256xf32>
    %24 = arith.mulf %21, %22 : vector<8x256xf32>
    %25 = math.log %24 : vector<8x256xf32>
    %26 = vector.broadcast %23 : vector<1x256xf32> to vector<8x256xf32>
    %27 = arith.addf %26, %25 : vector<8x256xf32>
    %cst_9 = arith.constant 1.000000e+00 : f32
    %28 = vector.broadcast %cst_9 : f32 to vector<8x256xf32>
    %29 = arith.mulf %27, %28 : vector<8x256xf32>
    %c0_10 = arith.constant 0 : index
    %c0_11 = arith.constant 0 : index
    %30 = vector.load %arg4[%c0_10, %c0_11] : memref<8x1xf32, #tpu.memory_space<vmem>>, vector<8x1xf32>
    %31 = vector.broadcast %30 : vector<8x1xf32> to vector<8x256xf32>
    %32 = arith.addf %29, %31 : vector<8x256xf32>
    %c0_12 = arith.constant 0 : index
    %c0_13 = arith.constant 0 : index
    %c0_14 = arith.constant 0 : index
    %33 = vector.load %arg5[%c0_12, %c0_13, %c0_14] : memref<1x8x256xf32, #tpu.memory_space<vmem>>, vector<1x8x256xf32>
    %34 = vector.shape_cast %33 : vector<1x8x256xf32> to vector<8x256xf32>
    %35 = vector.shape_cast %32 : vector<8x256xf32> to vector<1x8x256xf32>
    tpu.vector_store %arg5[%c0_12, %c0_13, %c0_14], %35 {strides = array<i32>} : memref<1x8x256xf32, #tpu.memory_space<vmem>>, vector<1x8x256xf32>,
    return
  }
  func.func @transform_0(%arg0: i32, %arg1: i32) -> (i32, i32, i32) {
    %c0_i32 = arith.constant 0 : i32
    %c0_i32_0 = arith.constant 0 : i32
    return %arg0, %c0_i32, %arg1 : i32, i32, i32
  }
  func.func @transform_1(%arg0: i32, %arg1: i32) -> (i32, i32) {
    %c0_i32 = arith.constant 0 : i32
    %c0_i32_0 = arith.constant 0 : i32
    %c0_i32_1 = arith.constant 0 : i32
    return %c0_i32, %c0_i32_0 : i32, i32
  }
  func.func @transform_2(%arg0: i32, %arg1: i32) -> (i32, i32) {
    %c0_i32 = arith.constant 0 : i32
    %c0_i32_0 = arith.constant 0 : i32
    %c0_i32_1 = arith.constant 0 : i32
    return %c0_i32, %c0_i32_0 : i32, i32
  }
  func.func @transform_3(%arg0: i32, %arg1: i32) -> (i32, i32, i32) {
    %c0_i32 = arith.constant 0 : i32
    %c0_i32_0 = arith.constant 0 : i32
    return %arg0, %c0_i32, %arg1 : i32, i32, i32
  }
}

</mosaic_0001>

<llo_original>
// kernel: tpu_custom_call.1
$region0: #{tpu_custom_call.1}
  #allocation0 [shape = 'u32[]', space=smem, size = 0x4, offset = 0x4, fixed_abs, tag = 'smem constant byte address 0x4 - core index']
  #allocation1 [shape = 'u32[72,128]{1,0:T(1,128)}', space=vmem, size = 0x9000, scoped, tag = 'internal scratch']
  %s0 = inlined_call_operand.hbm [shape: f32[2,40,256], index: 0, kind: input, shape index: {}]
  %s1 = inlined_call_operand.hbm [shape: f32[16,80], index: 1, kind: input, shape index: {}]
  %s2 = inlined_call_operand.vmem [shape: f32[8,1], index: 2, kind: input, shape index: {}]
  %s3 = inlined_call_operand.hbm [shape: f32[2,8,256], index: 3, kind: output, shape index: {}]
  %s4 = sld [smem:[#allocation0]]
  $region53: #{tpu_custom_call.1} parent=0
    _
  %s6 = ssub.s32 1, %s4
  %s7 = scalar_select 0, %s6, %s4
  $region1: #{tpu_custom_call.1} parent=0
    #allocation2 [shape = 'u8[81920]{0}', space=vmem, size = 0x14000, scoped, tag = 'input window, operand 0']
    #allocation3 [shape = 's32[2]{0}', space=sflag, size = 0x8, scoped, tag = 'scoped memory for tpu_custom_call.1']
    #allocation4 [shape = 's32[2]{0}', space=sflag, size = 0x8, scoped, tag = 'scoped memory for tpu_custom_call.1']
    #allocation5 [shape = 'u8[8192]{0}', space=vmem, size = 0x2000, scoped, tag = 'input window, operand 1, single buffered']
    #allocation6 [shape = 's32[1]{0}', space=sflag, size = 0x4, scoped, tag = 'scoped memory for tpu_custom_call.1']
    #allocation7 [shape = 'u8[16384]{0}', space=vmem, size = 0x4000, scoped, tag = 'output window, operand 0']
    %8 = vsyncpa [#allocation3], 0
    %s9 = scalar_lea.sflag [#allocation3], 1
    %10 = vsyncpa %s9, 0
    %11 = vsyncpa [#allocation6], 0
    %12 = vsyncpa [#allocation4], 0
    %s13 = scalar_lea.sflag [#allocation4], 1
    %14 = vsyncpa %s13, 0
    loop: start=0, step=1, limit=4
    $region2: #{tpu_custom_call.1} parent=1 // loop_pre_header
      _
    $region3: #{tpu_custom_call.1} parent=1 // loop_header
      %s16 = sphi 0, %s20
      %p17 = scmp.ge.s32.totalorder %s16, 4
      %s23 = sphi 0, %s35
      %s24 = sphi 0, %s31
      %s25 = sphi 0, %s23
      %s26 = sphi 0, %s24
      %s27 = sphi 0, %s25
      %s28 = sphi 0, %s26
      %s40 = sphi 0, %s42
      %s43 = sphi 0, %s40
      %s44 = sphi 0, %s43
      %s60 = sphi 0, %s44
      %s64 = sphi 0, %s64
      %s66 = sphi 0, %s64
      %s67 = sphi 0, %s66
      %s81 = sphi 0, %s67
      %s85 = sphi 0, %s85
      %s87 = sphi 0, %s85
      %s88 = sphi 0, %s87
      %s102 = sphi 0, %s88
      %s110 = sphi 0, %s112
      %s113 = sphi 0, %s110
      %s114 = sphi 0, %s113
      %s130 = sphi 0, %s114
    $region4: #{tpu_custom_call.1} parent=1 // loop_header_branch
      %19 = sbr.rel (%p17) target = $region8
    $region5: #{tpu_custom_call.1} parent=1 // loop_body
      %s21 = ssub.s32 %s16, 1
      %s22 = ssub.s32 %s16, 2
      %s29 = sadd.s32 1, %s24
      %p30 = scmp.ge.s32.totalorder %s29, 1
      %s31 = scalar_select %p30, 0, %s29
      %s32 = sadd.s32 1, %s23
      %s33 = scalar_select %p30, %s32, %s23
      %p34 = scmp.ge.s32.totalorder %s33, 2
      %s35 = scalar_select %p34, 0, %s33
      %s36 = ssub.s32 %s23, %s35
      %s37 = ssub.s32 %s24, %s31
      %s38 = sor.u32 %s36, %s37
      %p39 = scmp.eq.s32.totalorder %s38, 0
      %s41 = sadd.s32 %s40, 1
      %s42 = scalar_select %p39, %s40, %s41
      %p45 = pneg %p39
      %p46 = scmp.eq.s32.totalorder %s16, 1
      %p47 = por %p45, %p46
      %p48 = scmp.ne.s32.totalorder %s40, %s43
      %p49 = scmp.eq.s32.totalorder %s16, 0
      %p50 = por %p48, %p49
      %p51 = scmp.ne.s32.totalorder %s40, %s43
      %p52 = scmp.eq.s32.totalorder %s21, 1
      %p53 = por %p51, %p52
      %p54 = scmp.ne.s32.totalorder %s43, %s44
      %p55 = scmp.eq.s32.totalorder %s21, 0
      %p56 = por %p54, %p55
      %p57 = scmp.ne.s32.totalorder %s43, %s44
      %p58 = scmp.eq.s32.totalorder %s22, 1
      %p59 = por %p57, %p58
      %p61 = scmp.ne.s32.totalorder %s44, %s60
      %p62 = scmp.eq.s32.totalorder %s22, 0
      %p63 = por %p61, %p62
      %s65 = sadd.s32 %s64, 1
      %p68 = scmp.eq.s32.totalorder %s16, 1
      %p69 = scmp.ne.s32.totalorder %s64, %s66
      %p70 = scmp.eq.s32.totalorder %s16, 0
      %p71 = por %p69, %p70
      %p72 = scmp.ne.s32.totalorder %s64, %s66
      %p73 = scmp.eq.s32.totalorder %s21, 1
      %p74 = por %p72, %p73
      %p75 = scmp.ne.s32.totalorder %s66, %s67
      %p76 = scmp.eq.s32.totalorder %s21, 0
      %p77 = por %p75, %p76
      %p78 = scmp.ne.s32.totalorder %s66, %s67
      %p79 = scmp.eq.s32.totalorder %s22, 1
      %p80 = por %p78, %p79
      %p82 = scmp.ne.s32.totalorder %s67, %s81
      %p83 = scmp.eq.s32.totalorder %s22, 0
      %p84 = por %p82, %p83
      %s86 = sadd.s32 %s85, 1
      %p89 = scmp.eq.s32.totalorder %s16, 1
      %p90 = scmp.ne.s32.totalorder %s85, %s87
      %p91 = scmp.eq.s32.totalorder %s16, 0
      %p92 = por %p90, %p91
      %p93 = scmp.ne.s32.totalorder %s85, %s87
      %p94 = scmp.eq.s32.totalorder %s21, 1
      %p95 = por %p93, %p94
      %p96 = scmp.ne.s32.totalorder %s87, %s88
      %p97 = scmp.eq.s32.totalorder %s21, 0
      %p98 = por %p96, %p97
      %p99 = scmp.ne.s32.totalorder %s87, %s88
      %p100 = scmp.eq.s32.totalorder %s22, 1
      %p101 = por %p99, %p100
      %p103 = scmp.ne.s32.totalorder %s88, %s102
      %p104 = scmp.eq.s32.totalorder %s22, 0
      %p105 = por %p103, %p104
      %s106 = ssub.s32 %s23, %s35
      %s107 = ssub.s32 %s24, %s31
      %s108 = sor.u32 %s106, %s107
      %p109 = scmp.eq.s32.totalorder %s108, 0
      %s111 = sadd.s32 %s110, 1
      %s112 = scalar_select %p109, %s110, %s111
      %p115 = pneg %p109
      %p116 = scmp.eq.s32.totalorder %s16, 1
      %p117 = por %p115, %p116
      %p118 = scmp.ne.s32.totalorder %s110, %s113
      %p119 = scmp.eq.s32.totalorder %s16, 0
      %p120 = por %p118, %p119
      %p121 = scmp.ne.s32.totalorder %s110, %s113
      %p122 = scmp.eq.s32.totalorder %s21, 1
      %p123 = por %p121, %p122
      %p124 = scmp.ne.s32.totalorder %s113, %s114
      %p125 = scmp.eq.s32.totalorder %s21, 0
      %p126 = por %p124, %p125
      %p127 = scmp.ne.s32.totalorder %s113, %s114
      %p128 = scmp.eq.s32.totalorder %s22, 1
      %p129 = por %p127, %p128
      %p131 = scmp.ne.s32.totalorder %s114, %s130
      %p132 = scmp.eq.s32.totalorder %s22, 0
      %p133 = por %p131, %p132
      %p134 = scmp.le.s32.totalorder 1, %s16
      %p135 = scmp.lt.s32.totalorder %s16, 3
      %p136 = pnand %p134, %p135
      %p137 = pneg %p136
      // Predicated region
      $region9: #{tpu_custom_call.1} parent=5 // pred_check
        _
      $region10: #{tpu_custom_call.1} parent=5 // pred_check_branch
        %139 = sbr.rel (%p136) target = $region12
      $region11: #{tpu_custom_call.1} parent=5 // pred_region
        %s140 = ssub.s32 %s16, 1
        // Predicated region
        $region13: #{tpu_custom_call.1} parent=11 // pred_check
          %p141 = pneg %p77
        $region14: #{tpu_custom_call.1} parent=11 // pred_check_branch
          %143 = sbr.rel (%p141) target = $region16
        $region15: #{tpu_custom_call.1} parent=11 // pred_region
          %145 = vsyncadd [#allocation6], 0
          %s146 = sshll.u32 %s1, 4
          %s147 = int_to_ptr.hbm [resolvable:$true] %s146
          %s148 = sshll.u32 [#allocation5], 4
          %s149 = int_to_ptr.vmem [resolvable:$true] %s148
          %154 = dma.hbm_to_vmem [thread:$0]  %s147, 256, %s149, [#allocation6], 128, 128, 8
        $region16: #{tpu_custom_call.1} parent=11 // pred_fallthru
          _
        // Predicated region
        $region17: #{tpu_custom_call.1} parent=11 // pred_check
          %p155 = pneg %p98
        $region18: #{tpu_custom_call.1} parent=11 // pred_check_branch
          %157 = sbr.rel (%p155) target = $region20
        $region19: #{tpu_custom_call.1} parent=11 // pred_region
          _
        $region20: #{tpu_custom_call.1} parent=11 // pred_fallthru
          _
      $region12: #{tpu_custom_call.1} parent=5 // pred_fallthru
        _
      %p158 = scmp.lt.s32.totalorder %s16, 2
      // Predicated region
      $region21: #{tpu_custom_call.1} parent=5 // pred_check
        %p159 = pneg %p158
      $region22: #{tpu_custom_call.1} parent=5 // pred_check_branch
        %161 = sbr.rel (%p159) target = $region24
      $region23: #{tpu_custom_call.1} parent=5 // pred_region
        // Predicated region
        $region25: #{tpu_custom_call.1} parent=23 // pred_check
          %p162 = pneg %p50
        $region26: #{tpu_custom_call.1} parent=23 // pred_check_branch
          %164 = sbr.rel (%p162) target = $region28
        $region27: #{tpu_custom_call.1} parent=23 // pred_region
          %s165 = sand.u32 %s40, 1
          %s166 = scalar_lea.sflag [#allocation3], %s165
          %s167 = sand.u32 %s40, 1
          %s168 = smul.addr %s167, 80
          %s169 = scalar_lea.vmem [#allocation2], %s168
          %s170 = smul.u32 2, %s24
          %172 = vsyncadd %s166, 0
          %s173 = smul.addr %s23, 10
          %s174 = sadd.s32 %s170, %s173
          %s175 = smul.addr %s174, 8
          %s176 = scalar_lea.hbm %s0, %s175
          %s177 = sshll.u32 %s176, 4
          %s178 = int_to_ptr.hbm [resolvable:$true] %s177
          %s179 = sshll.u32 %s169, 4
          %s180 = int_to_ptr.vmem [resolvable:$true] %s179
          %185 = dma.hbm_to_vmem [thread:$0]  %s178, 1280, %s180, %s166, 256, 256, 16
        $region28: #{tpu_custom_call.1} parent=23 // pred_fallthru
          _
      $region24: #{tpu_custom_call.1} parent=5 // pred_fallthru
        _
      %p186 = scmp.le.s32.totalorder 1, %s16
      %p187 = scmp.lt.s32.totalorder %s16, 3
      %p188 = pnand %p186, %p187
      %p189 = pneg %p188
      // Predicated region
      $region29: #{tpu_custom_call.1} parent=5 // pred_check
        _
      $region30: #{tpu_custom_call.1} parent=5 // pred_check_branch
        %191 = sbr.rel (%p188) target = $region32
      $region31: #{tpu_custom_call.1} parent=5 // pred_region
        %s192 = ssub.s32 %s16, 1
        %s193 = sand.u32 %s43, 1
        %s194 = scalar_lea.sflag [#allocation3], %s193
        %s195 = sand.u32 %s43, 1
        %s196 = smul.addr %s195, 80
        %s197 = scalar_lea.vmem [#allocation2], %s196
        // Predicated region
        $region33: #{tpu_custom_call.1} parent=31 // pred_check
          %p198 = pneg %p56
        $region34: #{tpu_custom_call.1} parent=31 // pred_check_branch
          %200 = sbr.rel (%p198) target = $region36
        $region35: #{tpu_custom_call.1} parent=31 // pred_region
          %202 = dma.done %s194, 1280
        $region36: #{tpu_custom_call.1} parent=31 // pred_fallthru
          _
        // Predicated region
        $region37: #{tpu_custom_call.1} parent=31 // pred_check
          %p203 = pneg %p77
        $region38: #{tpu_custom_call.1} parent=31 // pred_check_branch
          %205 = sbr.rel (%p203) target = $region40
        $region39: #{tpu_custom_call.1} parent=31 // pred_region
          %207 = dma.done [#allocation6], 256
        $region40: #{tpu_custom_call.1} parent=31 // pred_fallthru
          _
        %s208 = sand.u32 %s43, 1
        %s209 = scalar_lea.sflag [#allocation3], %s208
        %s210 = sand.u32 %s43, 1
        %s211 = smul.addr %s210, 80
        %s212 = scalar_lea.vmem [#allocation2], %s211
        %p213 = pneg %p56
        %p214 = pneg %p53
        %p215 = pneg %p77
        %p216 = pneg %p74
        %p217 = pneg %p98
        %p218 = pneg %p95
        %p219 = pneg %p126
        %p220 = pneg %p123
        %s221 = sand.u32 %s113, 1
        %s222 = scalar_lea.sflag [#allocation4], %s221
        %s223 = sand.u32 %s113, 1
        %s224 = smul.addr %s223, 16
        %s225 = scalar_lea.vmem [#allocation7], %s224
        %s226 = smul.u32 2, %s26
        %s227 = smul.u32 2, %s26
        %v228 = vld [vmem:[%s197] sm:$0xff]
        %v229 = vld [vmem:[%s197 + $0x8] sm:$0xff]
        %v230 = vld [vmem:[%s197 + $0x10] sm:$0xff]
        %v231 = vld [vmem:[%s197 + $0x18] sm:$0xff]
        %v232 = vld [vmem:[%s197 + $0x20] sm:$0xff]
        %v233 = vld [vmem:[%s197 + $0x28] sm:$0xff]
        %v234 = vld [vmem:[%s197 + $0x30] sm:$0xff]
        %v235 = vld [vmem:[%s197 + $0x38] sm:$0xff]
        %v236 = vld [vmem:[%s197 + $0x40] sm:$0xff]
        %v237 = vld [vmem:[%s197 + $0x48] sm:$0xff]
        %v238 = vmax.f32 %v228, %v232
        %v239 = vmax.f32 %v230, %v234
        %v240 = vmax.f32 %v238, %v236
        %v241 = vmax.f32 %v240, %v239
        %v242 = vrot.slane %v241, 4
        %v243 = vmax.f32 %v241, %v242
        %v244 = vrot.slane %v243, 2
        %v245 = vmax.f32 %v243, %v244
        %v246 = vrot.slane %v245, 1
        %v247 = vmax.f32 %v245, %v246
        %v248 = vmax.f32 %v229, %v233
        %v249 = vmax.f32 %v231, %v235
        %v250 = vmax.f32 %v248, %v237
        %v251 = vmax.f32 %v250, %v249
        %v252 = vrot.slane %v251, 4
        %v253 = vmax.f32 %v251, %v252
        %v254 = vrot.slane %v253, 2
        %v255 = vmax.f32 %v253, %v254
        %v256 = vrot.slane %v255, 1
        %v257 = vmax.f32 %v255, %v256
        %v258 = vmin.f32 %v228, %v232
        %v259 = vmin.f32 %v230, %v234
        %v260 = vmin.f32 %v258, %v236
        %v261 = vmin.f32 %v260, %v259
        %v262 = vrot.slane %v261, 4
        %v263 = vmin.f32 %v261, %v262
        %v264 = vrot.slane %v263, 2
        %v265 = vmin.f32 %v263, %v264
        %v266 = vrot.slane %v265, 1
        %v267 = vmin.f32 %v265, %v266
        %v268 = vmin.f32 %v229, %v233
        %v269 = vmin.f32 %v231, %v235
        %v270 = vmin.f32 %v268, %v237
        %v271 = vmin.f32 %v270, %v269
        %v272 = vrot.slane %v271, 4
        %v273 = vmin.f32 %v271, %v272
        %v274 = vrot.slane %v273, 2
        %v275 = vmin.f32 %v273, %v274
        %v276 = vrot.slane %v275, 1
        %v277 = vmin.f32 %v275, %v276
        %v278 = vsub.f32 0.0, %v267
        %v279 = vsub.f32 0.0, %v277
        %v280 = vsub.f32 %v228, %v247
        %v281 = vsub.f32 %v229, %v257
        %v282 = vsub.f32 %v230, %v247
        %v283 = vsub.f32 %v231, %v257
        %v284 = vsub.f32 %v232, %v247
        %v285 = vsub.f32 %v233, %v257
        %v286 = vsub.f32 %v234, %v247
        %v287 = vsub.f32 %v235, %v257
        %v288 = vsub.f32 %v236, %v247
        %v289 = vsub.f32 %v237, %v257
        %v290 = vmul.f32 %v280, 1.442695
        %v291 = vpow.pop %v290
        %v292 = vmul.f32 %v281, 1.442695
        %v293 = vpow.pop %v292
        %v294 = vmul.f32 %v282, 1.442695
        %v295 = vpow.pop %v294
        %v296 = vmul.f32 %v283, 1.442695
        %v297 = vpow.pop %v296
        %v298 = vmul.f32 %v284, 1.442695
        %v299 = vpow.pop %v298
        %v300 = vmul.f32 %v285, 1.442695
        %v301 = vpow.pop %v300
        %v302 = vmul.f32 %v286, 1.442695
        %v303 = vpow.pop %v302
        %v304 = vmul.f32 %v287, 1.442695
        %v305 = vpow.pop %v304
        %v306 = vmul.f32 %v288, 1.442695
        %v307 = vpow.pop %v306
        %v308 = vmul.f32 %v289, 1.442695
        %v309 = vpow.pop %v308
        %v310 = vsub.f32 0.0, %v228
        %v311 = vsub.f32 0.0, %v229
        %v312 = vsub.f32 0.0, %v230
        %v313 = vsub.f32 0.0, %v231
        %v314 = vsub.f32 0.0, %v232
        %v315 = vsub.f32 0.0, %v233
        %v316 = vsub.f32 0.0, %v234
        %v317 = vsub.f32 0.0, %v235
        %v318 = vsub.f32 0.0, %v236
        %v319 = vsub.f32 0.0, %v237
        %v320 = vsub.f32 %v310, %v278
        %v321 = vsub.f32 %v311, %v279
        %v322 = vsub.f32 %v312, %v278
        %v323 = vsub.f32 %v313, %v279
        %v324 = vsub.f32 %v314, %v278
        %v325 = vsub.f32 %v315, %v279
        %v326 = vsub.f32 %v316, %v278
        %v327 = vsub.f32 %v317, %v279
        %v328 = vsub.f32 %v318, %v278
        %v329 = vsub.f32 %v319, %v279
        %v330 = vmul.f32 %v320, 1.442695
        %v331 = vpow.pop %v330
        %v332 = vmul.f32 %v321, 1.442695
        %v333 = vpow.pop %v332
        %v334 = vmul.f32 %v322, 1.442695
        %v335 = vpow.pop %v334
        %v336 = vmul.f32 %v323, 1.442695
        %v337 = vpow.pop %v336
        %v338 = vmul.f32 %v324, 1.442695
        %v339 = vpow.pop %v338
        %v340 = vmul.f32 %v325, 1.442695
        %v341 = vpow.pop %v340
        %v342 = vmul.f32 %v326, 1.442695
        %v343 = vpow.pop %v342
        %v344 = vmul.f32 %v327, 1.442695
        %v345 = vpow.pop %v344
        %v346 = vmul.f32 %v328, 1.442695
        %v347 = vpow.pop %v346
        %v348 = vmul.f32 %v329, 1.442695
        %v349 = vpow.pop %v348
        %v350 = vld [vmem:[#allocation5] sm:$0xff]
        %v351 = vld [vmem:[#allocation5 + $0x8] sm:$0xff]
        %vm352 = vcmask 654336
        %v354 = vsel %vm352, %v350, 0
        %v357 = vsel %vm352, %v351, 0
        %359 = vmatpush.msra.mxu0 0.0
        %360 = vmatpush.msra.mxu0 0.0
        %361 = vmatpush.msra.mxu0 0.0
        %362 = vmatpush.msra.mxu0 0.0
        %363 = vmatpush.msra.mxu0 0.0
        %364 = vmatpush.msra.mxu0 0.0
        %365 = vmatpush.msra.mxu0 %v347
        %366 = vmatpush.msra.mxu0 %v343
        %367 = vmatpush.msra.mxu0 %v339
        %368 = vmatpush.msra.mxu0 %v335
        %369 = vmatpush.msra.mxu0 %v331
        %370 = vmatpush.msra.mxu0 %v307
        %371 = vmatpush.msra.mxu0 %v303
        %372 = vmatpush.msra.mxu0 %v299
        %373 = vmatpush.msra.mxu0 %v295
        %374 = vmatpush.msra.mxu0 %v291
        %375 = vmatmul.f32.gmra.mxu0 %v354
        %v376 = vpop.f32.mrf.mxu0
        %v377 = vadd.f32 0.0, %v376
        %378 = vmatmul.f32.gmra.mxu0 %v357
        %v379 = vpop.f32.mrf.mxu0
        %v380 = vadd.f32 0.0, %v379
        %381 = vdwg.mxu0
        %382 = vmatpush.msra.mxu0 0.0
        %383 = vmatpush.msra.mxu0 0.0
        %384 = vmatpush.msra.mxu0 0.0
        %385 = vmatpush.msra.mxu0 0.0
        %386 = vmatpush.msra.mxu0 0.0
        %387 = vmatpush.msra.mxu0 0.0
        %388 = vmatpush.msra.mxu0 %v349
        %389 = vmatpush.msra.mxu0 %v345
        %390 = vmatpush.msra.mxu0 %v341
        %391 = vmatpush.msra.mxu0 %v337
        %392 = vmatpush.msra.mxu0 %v333
        %393 = vmatpush.msra.mxu0 %v309
        %394 = vmatpush.msra.mxu0 %v305
        %395 = vmatpush.msra.mxu0 %v301
        %396 = vmatpush.msra.mxu0 %v297
        %397 = vmatpush.msra.mxu0 %v293
        %398 = vmatmul.f32.gmra.mxu0 %v354
        %v399 = vpop.f32.mrf.mxu0
        %v400 = vadd.f32 0.0, %v399
        %401 = vmatmul.f32.gmra.mxu0 %v357
        %v402 = vpop.f32.mrf.mxu0
        %v403 = vadd.f32 0.0, %v402
        %404 = vdwg.mxu0
        %v405 = vadd.f32 %v247, %v278
        %v406 = vadd.f32 %v257, %v279
        %v407 = vmul.f32 %v377, %v380
        %v408 = vmul.f32 %v400, %v403
        %v409 = vlog2.pop %v407
        %v410 = vmul.f32 %v409, 0.6931472
        %v411 = vlog2.pop %v408
        %v412 = vmul.f32 %v411, 0.6931472
        %v413 = vadd.f32 %v405, %v410
        %v414 = vadd.f32 %v406, %v412
        %v415 = vld [vmem:[%s2] sm:$0xff]
        %417 = vset.pattern.permute.xlu0 0
        %418 = vperm.xlu0 %417, %v415
        %v419 = vpop.permute.xlu0 %418
        %v421 = vadd.f32 %v413, %v419
        %v422 = vadd.f32 %v414, %v419
        %423 = vst [vmem:[%s225] sm:$0xff] %v421
        %424 = vst [vmem:[%s225 + $0x8] sm:$0xff] %v422
        %s425 = sand.u32 %s113, 1
        %s426 = scalar_lea.sflag [#allocation4], %s425
        %s427 = sand.u32 %s113, 1
        %s428 = smul.addr %s427, 16
        %s429 = scalar_lea.vmem [#allocation7], %s428
        // Predicated region
        $region41: #{tpu_custom_call.1} parent=31 // pred_check
          %p430 = pneg %p123
        $region42: #{tpu_custom_call.1} parent=31 // pred_check_branch
          %432 = sbr.rel (%p430) target = $region44
        $region43: #{tpu_custom_call.1} parent=31 // pred_region
          %s433 = smul.u32 2, %s26
          %435 = vsyncadd %s426, 0
          %s436 = smul.addr %s25, 2
          %s437 = sadd.s32 %s433, %s436
          %s438 = smul.addr %s437, 8
          %s439 = scalar_lea.hbm %s3, %s438
          %s441 = sshll.u32 %s429, 4
          %s442 = int_to_ptr.vmem [resolvable:$true] %s441
          %s443 = sshll.u32 %s439, 4
          %s444 = int_to_ptr.hbm [resolvable:$true] %s443
          %446 = dma.vmem_to_hbm [thread:$0]  %s442, 256, %s444, %s426
        $region44: #{tpu_custom_call.1} parent=31 // pred_fallthru
          _
      $region32: #{tpu_custom_call.1} parent=5 // pred_fallthru
        _
      %p447 = scmp.le.s32.totalorder 2, %s16
      // Predicated region
      $region45: #{tpu_custom_call.1} parent=5 // pred_check
        %p448 = pneg %p447
      $region46: #{tpu_custom_call.1} parent=5 // pred_check_branch
        %450 = sbr.rel (%p448) target = $region48
      $region47: #{tpu_custom_call.1} parent=5 // pred_region
        %s451 = ssub.s32 %s16, 2
        // Predicated region
        $region49: #{tpu_custom_call.1} parent=47 // pred_check
          %p452 = pneg %p129
        $region50: #{tpu_custom_call.1} parent=47 // pred_check_branch
          %454 = sbr.rel (%p452) target = $region52
        $region51: #{tpu_custom_call.1} parent=47 // pred_region
          %s455 = sand.u32 %s114, 1
          %s456 = scalar_lea.sflag [#allocation4], %s455
          %s457 = sand.u32 %s114, 1
          %s458 = smul.addr %s457, 16
          %s459 = scalar_lea.vmem [#allocation7], %s458
          %461 = dma.done %s456, 256
        $region52: #{tpu_custom_call.1} parent=47 // pred_fallthru
          _
      $region48: #{tpu_custom_call.1} parent=5 // pred_fallthru
        _
    $region6: #{tpu_custom_call.1} parent=1 // loop_footer
      %s20 = sadd.s32 1, %s16
    $region7: #{tpu_custom_call.1} parent=1 // loop_footer_branch
      %15 = sbr.rel target = $region3
    $region8: #{tpu_custom_call.1} parent=1 // loop_exit
      _
    %462 = vsyncpa [#allocation3], 1
    %s463 = scalar_lea.sflag [#allocation3], 1
    %464 = vsyncpa %s463, 1
    %465 = vsyncpa [#allocation6], 1
    %466 = vsyncpa [#allocation4], 1
    %s467 = scalar_lea.sflag [#allocation4], 1
    %468 = vsyncpa %s467, 1

</llo_original>
